<compile_context>
chip_gen: v6e
topology: v6e:2x2x1
jax: 0.10.0
libtpu: 0.0.40
codegen_flags: <defaults>
</compile_context>

<pallas_src>
from functools import partial

import jax
import jax.numpy as jnp
from jax import lax
from jax.experimental import pallas as pl
from jax.experimental.pallas import tpu as pltpu
import numpy as np


def _r5_partial_kernel(feat_ref, cent_ref, c2_ref,
                       pos_ref, cnt_ref, neg_ref,
                       *, inv_tau, n_valid, block_n):
    """Per-N-tile partial sums for the contrastive loss, (K, N)-oriented."""
    i = pl.program_id(0)

    feat = feat_ref[...]                     # (TN, D), native dtype
    cent = cent_ref[...]                     # (K, D),  native dtype
    K = cent.shape[0]

    # fc[k, n] = <cent_k, feat_n>; contract on D, f32 accumulation on the MXU.
    fc = lax.dot_general(cent, feat, (((1,), (1,)), ((), ())),
                         preferred_element_type=jnp.float32)        # (K, TN)

    # argmin_k ||feat_n - cent_k||^2 == argmin_k (||c_k||^2 - 2*fc[k, n]);
    # the per-sample ||feat_n||^2 term is constant over k and dropped.
    dist = c2_ref[...] - 2.0 * fc                                   # (K, TN)
    idx_k = lax.broadcasted_iota(jnp.int32, dist.shape, 0)          # (K, TN)
    min_d = jnp.min(dist, axis=0, keepdims=True)                    # (1, TN)
    pred = jnp.min(jnp.where(dist <= min_d, idx_k, K),
                   axis=0, keepdims=True)                           # (1, TN)
    onehot = (idx_k == pred).astype(jnp.float32)                    # (K, TN)

    # Lane mask for rows that were zero-padded up to a multiple of block_n.
    row = i * block_n + lax.broadcasted_iota(jnp.int32, (1, block_n), 1)
    mask = (row < n_valid).astype(jnp.float32)                      # (1, TN)

    # NOTE: exp(fc/tau) without max-subtraction matches the PyTorch reference
    # (which would overflow just the same for unbounded inputs / tiny tau).
    e = jnp.exp(fc * inv_tau) * mask                                # (K, TN)

    pos_ref[0] = jnp.sum(onehot * e, axis=1, keepdims=True)         # (K, 1)
    cnt_ref[0] = jnp.sum(onehot * mask, axis=1, keepdims=True)      # (K, 1)
    neg_ref[0] = jnp.sum(e, axis=1, keepdims=True)                  # (K, 1)


def r5_cl_loss(feat, centroids, *, tau, block_n=512):
    """Pairwise-distance argmin + contrastive loss, streamed over N."""
    N, D = feat.shape
    K = centroids.shape[0]

    block_n = max(8, min(block_n, pl.cdiv(N, 8) * 8))
    num_tiles = pl.cdiv(N, block_n)
    n_pad = num_tiles * block_n
    if n_pad != N:
        feat = jnp.pad(feat, ((0, n_pad - N), (0, 0)))

    # Hoisted grid-invariant: ||cent_k||^2 in f32.
    c2 = jnp.sum(centroids.astype(jnp.float32) ** 2, axis=-1, keepdims=True)  # (K, 1)

    partial_shape = jax.ShapeDtypeStruct((num_tiles, K, 1), jnp.float32)
    partial_spec = pl.BlockSpec((1, K, 1), lambda i: (i, 0, 0))

    pos, cnt, neg = pl.pallas_call(
        partial(_r5_partial_kernel, inv_tau=1.0 / tau, n_valid=N, block_n=block_n),
        grid=(num_tiles,),
        in_specs=[
            pl.BlockSpec((block_n, D), lambda i: (i, 0)),   # feat tile (streamed)
            pl.BlockSpec((K, D), lambda i: (0, 0)),         # centroids (resident)
            pl.BlockSpec((K, 1), lambda i: (0, 0)),         # ||cent||^2 (resident)
        ],
        out_specs=[partial_spec, partial_spec, partial_spec],
        out_shape=[partial_shape, partial_shape, partial_shape],
        compiler_params=pltpu.CompilerParams(
            dimension_semantics=("parallel",),              # lets v7x use both TCs
            vmem_limit_bytes=32 * 1024 * 1024,
        ),
    )(feat, centroids, c2)

    # Tiny cross-tile combine + finalize (K values each) in plain JAX.
    pos = jnp.sum(pos[..., 0], axis=0)                       # (K,)
    cnt = jnp.sum(cnt[..., 0], axis=0)                       # (K,)
    neg = jnp.sum(neg[..., 0], axis=0)                       # (K,)

    neg_mean = neg * (1.0 / float(N))
    pos_mean = pos / jnp.maximum(cnt, 1.0)
    # cluster contributes only if both feat[pred==k] and feat[pred!=k] non-empty
    valid = jnp.logical_and(cnt > 0.5, cnt < (float(N) - 0.5))
    terms = jnp.where(valid, jnp.log(pos_mean / neg_mean), 0.0)
    return -jnp.sum(terms) / float(K)


def r5_forward(feat, centroids, epoch, *, tau=1.0, weight=5.0, block_n=512):
    """R5.forward. Default-datatype config: init_K=5, weight=5.

    `epoch` must be a static Python int (matches the PyTorch Python-level
    branch); wrap in lax.cond yourself if it must be traced.
    """
    if epoch <= 99:                       # PyTorch: cl_loss = 0
        return jnp.float32(0.0)
    # TODO(synk): split_and_merge_op (DPM split/merge) not available; centroids
    # are supplied deterministically by the caller instead.
    return r5_cl_loss(feat, centroids, tau=tau, block_n=block_n) * weight


def _r5_ref(feat, cent, *, tau, weight):
    """Pure-JAX reference mirroring the PyTorch CL loop exactly."""
    dist = jnp.sum((feat[:, None, :] - cent[None, :, :]) ** 2, axis=-1)
    pred = jnp.argmin(dist, axis=1)
    N, K = feat.shape[0], cent.shape[0]
    loss = 0.0
    for k in range(K):
        mask = pred == k
        npos = jnp.sum(mask)
        e = jnp.exp(feat @ cent[k] / tau)
        pos = jnp.sum(jnp.where(mask, e, 0.0)) / jnp.maximum(npos, 1)
        neg = jnp.mean(e)
        term = jnp.where((npos > 0) & (npos < N), jnp.log(pos / neg), 0.0)
        loss = loss - term
    return loss / K * weight


if __name__ == "__main__":
    key = jax.random.PRNGKey(0)
    N, D, K = 500, 32, 5          # default datatype -> Arg(init_K=5), weight=5
    tau, weight = 1.0, 5.0

    feat = 0.5 * jax.random.normal(key, (N, D), dtype=jnp.float32)
    # deterministic centroids (stand-in for split_and_merge_op): evenly spaced rows
    centroids = feat[jnp.arange(K) * (N // K)]

    # block_n=128 -> 4 grid steps, last tile partially masked (N=500 not a multiple)
    loss = r5_forward(feat, centroids, epoch=100, tau=tau, weight=weight, block_n=128)
    loss = jax.block_until_ready(loss)

    ref = jax.block_until_ready(_r5_ref(feat, centroids, tau=tau, weight=weight))
    np.testing.assert_allclose(np.asarray(loss), np.asarray(ref), rtol=2e-2, atol=1e-3)

    # single-tile path (block_n >= N) must also match
    loss1 = jax.block_until_ready(
        r5_forward(feat, centroids, epoch=100, tau=tau, weight=weight, block_n=512))
    np.testing.assert_allclose(np.asarray(loss1), np.asarray(ref), rtol=2e-2, atol=1e-3)

    # epoch <= 99 path returns 0
    zero = r5_forward(feat, centroids, epoch=10, tau=tau, weight=weight)
    assert float(zero) == 0.0

    print("KERNEL_OK")
</pallas_src>

<mosaic_0001>
module attributes {stable_mosaic.version = 11 : i64} {
  func.func @_r5_partial_kernel(%arg0: i32, %arg1: memref<128x32xf32, #tpu.memory_space<vmem>>, %arg2: memref<5x32xf32, #tpu.memory_space<vmem>>, %arg3: memref<5x1xf32, #tpu.memory_space<vmem>>, %arg4: memref<1x5x1xf32, #tpu.memory_space<vmem>>, %arg5: memref<1x5x1xf32, #tpu.memory_space<vmem>>, %arg6: memref<1x5x1xf32, #tpu.memory_space<vmem>>) attributes {dimension_semantics = [#tpu.dimension_semantics<parallel>], iteration_bounds = array<i64: 4>, scalar_prefetch = 0 : i64, scratch_operands = 0 : i64, tpu.core_type = #tpu.core_type<tc>, window_params = [{transform_indices = @transform_0, window_bounds = array<i64: 128, 32>}, {pipeline_mode = #tpu.pipeline_mode<synchronous>, transform_indices = @transform_1, window_bounds = array<i64: 5, 32>}, {pipeline_mode = #tpu.pipeline_mode<synchronous>, transform_indices = @transform_2, window_bounds = array<i64: 5, 1>}, {transform_indices = @transform_3, window_bounds = array<i64: 1, 5, 1>}, {transform_indices = @transform_4, window_bounds = array<i64: 1, 5, 1>}, {transform_indices = @transform_5, window_bounds = array<i64: 1, 5, 1>}]} {
    %c0 = arith.constant 0 : index
    %c0_0 = arith.constant 0 : index
    %0 = vector.load %arg1[%c0, %c0_0] : memref<128x32xf32, #tpu.memory_space<vmem>>, vector<128x32xf32>
    %c0_1 = arith.constant 0 : index
    %c0_2 = arith.constant 0 : index
    %1 = vector.load %arg2[%c0_1, %c0_2] : memref<5x32xf32, #tpu.memory_space<vmem>>, vector<5x32xf32>
    %cst = arith.constant dense<0.000000e+00> : vector<5x128xf32>
    %2 = tpu.matmul %1, %0, %cst {dimension_numbers = #tpu.dot_dimension_numbers<[1], [1], [0], [0], [0, 0, 1, 0], [], []>} : vector<5x32xf32>, vector<128x32xf32>, vector<5x128xf32> -> vector<5x128xf32>
    %c0_3 = arith.constant 0 : index
    %c0_4 = arith.constant 0 : index
    %3 = vector.load %arg3[%c0_3, %c0_4] : memref<5x1xf32, #tpu.memory_space<vmem>>, vector<5x1xf32>
    %cst_5 = arith.constant 2.000000e+00 : f32
    %4 = vector.broadcast %cst_5 : f32 to vector<5x128xf32>
    %5 = arith.mulf %4, %2 : vector<5x128xf32>
    %6 = vector.broadcast %3 : vector<5x1xf32> to vector<5x128xf32>
    %7 = arith.subf %6, %5 : vector<5x128xf32>
    %8 = tpu.iota {dimensions = array<i32: 0>} : vector<5x128xi32>
    %cst_6 = arith.constant dense<0x7F800000> : vector<128xf32>
    %9 = vector.multi_reduction <minimumf>, %7, %cst_6 [0] : vector<5x128xf32> to vector<128xf32>
    %10 = vector.shape_cast %9 : vector<128xf32> to vector<1x128xf32>
    %11 = vector.broadcast %10 : vector<1x128xf32> to vector<5x128xf32>
    %12 = arith.cmpf ole, %7, %11 : vector<5x128xf32>
    %c5_i32 = arith.constant 5 : i32
    %13 = vector.broadcast %c5_i32 : i32 to vector<5x128xi32>
    %14 = arith.select %12, %8, %13 : vector<5x128xi1>, vector<5x128xi32>
    %cst_7 = arith.constant dense<2147483647> : vector<128xi32>
    %15 = vector.multi_reduction <minsi>, %14, %cst_7 [0] : vector<5x128xi32> to vector<128xi32>
    %16 = vector.shape_cast %15 : vector<128xi32> to vector<1x128xi32>
    %17 = vector.broadcast %16 : vector<1x128xi32> to vector<5x128xi32>
    %18 = arith.cmpi eq, %8, %17 : vector<5x128xi32>
    %19 = arith.extui %18 : vector<5x128xi1> to vector<5x128xi32>
    %20 = arith.sitofp %19 : vector<5x128xi32> to vector<5x128xf32>
    %c128_i32 = arith.constant 128 : i32
    %21 = arith.muli %arg0, %c128_i32 : i32
    %22 = tpu.iota {dimensions = array<i32: 1>} : vector<1x128xi32>
    %23 = vector.broadcast %21 : i32 to vector<1x128xi32>
    %24 = arith.addi %23, %22 : vector<1x128xi32>
    %c500_i32 = arith.constant 500 : i32
    %25 = vector.broadcast %c500_i32 : i32 to vector<1x128xi32>
    %26 = arith.cmpi slt, %24, %25 : vector<1x128xi32>
    %27 = arith.extui %26 : vector<1x128xi1> to vector<1x128xi32>
    %28 = arith.sitofp %27 : vector<1x128xi32> to vector<1x128xf32>
    %cst_8 = arith.constant 1.000000e+00 : f32
    %29 = vector.broadcast %cst_8 : f32 to vector<5x128xf32>
    %30 = arith.mulf %2, %29 : vector<5x128xf32>
    %31 = math.exp %30 : vector<5x128xf32>
    %32 = vector.broadcast %28 : vector<1x128xf32> to vector<5x128xf32>
    %33 = arith.mulf %31, %32 : vector<5x128xf32>
    %34 = arith.mulf %20, %33 : vector<5x128xf32>
    %cst_9 = arith.constant dense<0.000000e+00> : vector<5xf32>
    %35 = vector.multi_reduction <add>, %34, %cst_9 [1] : vector<5x128xf32> to vector<5xf32>
    %36 = vector.shape_cast %35 : vector<5xf32> to vector<5x1xf32>
    %c0_10 = arith.constant 0 : index
    %c0_11 = arith.constant 0 : index
    %c0_12 = arith.constant 0 : index
    %37 = vector.load %arg4[%c0_10, %c0_11, %c0_12] : memref<1x5x1xf32, #tpu.memory_space<vmem>>, vector<1x5x1xf32>
    %38 = vector.shape_cast %37 : vector<1x5x1xf32> to vector<5x1xf32>
    %39 = vector.shape_cast %36 : vector<5x1xf32> to vector<1x5x1xf32>
    tpu.vector_store %arg4[%c0_10, %c0_11, %c0_12], %39 {strides = array<i32>} : memref<1x5x1xf32, #tpu.memory_space<vmem>>, vector<1x5x1xf32>,
    %40 = vector.broadcast %28 : vector<1x128xf32> to vector<5x128xf32>
    %41 = arith.mulf %20, %40 : vector<5x128xf32>
    %cst_13 = arith.constant dense<0.000000e+00> : vector<5xf32>
    %42 = vector.multi_reduction <add>, %41, %cst_13 [1] : vector<5x128xf32> to vector<5xf32>
    %43 = vector.shape_cast %42 : vector<5xf32> to vector<5x1xf32>
    %c0_14 = arith.constant 0 : index
    %c0_15 = arith.constant 0 : index
    %c0_16 = arith.constant 0 : index
    %44 = vector.load %arg5[%c0_14, %c0_15, %c0_16] : memref<1x5x1xf32, #tpu.memory_space<vmem>>, vector<1x5x1xf32>
    %45 = vector.shape_cast %44 : vector<1x5x1xf32> to vector<5x1xf32>
    %46 = vector.shape_cast %43 : vector<5x1xf32> to vector<1x5x1xf32>
    tpu.vector_store %arg5[%c0_14, %c0_15, %c0_16], %46 {strides = array<i32>} : memref<1x5x1xf32, #tpu.memory_space<vmem>>, vector<1x5x1xf32>,
    %cst_17 = arith.constant dense<0.000000e+00> : vector<5xf32>
    %47 = vector.multi_reduction <add>, %33, %cst_17 [1] : vector<5x128xf32> to vector<5xf32>
    %48 = vector.shape_cast %47 : vector<5xf32> to vector<5x1xf32>
    %c0_18 = arith.constant 0 : index
    %c0_19 = arith.constant 0 : index
    %c0_20 = arith.constant 0 : index
    %49 = vector.load %arg6[%c0_18, %c0_19, %c0_20] : memref<1x5x1xf32, #tpu.memory_space<vmem>>, vector<1x5x1xf32>
    %50 = vector.shape_cast %49 : vector<1x5x1xf32> to vector<5x1xf32>
    %51 = vector.shape_cast %48 : vector<5x1xf32> to vector<1x5x1xf32>
    tpu.vector_store %arg6[%c0_18, %c0_19, %c0_20], %51 {strides = array<i32>} : memref<1x5x1xf32, #tpu.memory_space<vmem>>, vector<1x5x1xf32>,
    return
  }
  func.func @transform_0(%arg0: i32) -> (i32, i32) {
    %c0_i32 = arith.constant 0 : i32
    %c0_i32_0 = arith.constant 0 : i32
    return %arg0, %c0_i32 : i32, i32
  }
  func.func @transform_1(%arg0: i32) -> (i32, i32) {
    %c0_i32 = arith.constant 0 : i32
    %c0_i32_0 = arith.constant 0 : i32
    %c0_i32_1 = arith.constant 0 : i32
    return %c0_i32, %c0_i32_0 : i32, i32
  }
  func.func @transform_2(%arg0: i32) -> (i32, i32) {
    %c0_i32 = arith.constant 0 : i32
    %c0_i32_0 = arith.constant 0 : i32
    %c0_i32_1 = arith.constant 0 : i32
    return %c0_i32, %c0_i32_0 : i32, i32
  }
  func.func @transform_3(%arg0: i32) -> (i32, i32, i32) {
    %c0_i32 = arith.constant 0 : i32
    %c0_i32_0 = arith.constant 0 : i32
    %c0_i32_1 = arith.constant 0 : i32
    return %arg0, %c0_i32, %c0_i32_0 : i32, i32, i32
  }
  func.func @transform_4(%arg0: i32) -> (i32, i32, i32) {
    %c0_i32 = arith.constant 0 : i32
    %c0_i32_0 = arith.constant 0 : i32
    %c0_i32_1 = arith.constant 0 : i32
    return %arg0, %c0_i32, %c0_i32_0 : i32, i32, i32
  }
  func.func @transform_5(%arg0: i32) -> (i32, i32, i32) {
    %c0_i32 = arith.constant 0 : i32
    %c0_i32_0 = arith.constant 0 : i32
    %c0_i32_1 = arith.constant 0 : i32
    return %arg0, %c0_i32, %c0_i32_0 : i32, i32, i32
  }
}

</mosaic_0001>

<llo_original>
// kernel: tpu_custom_call.1
$region0: #{tpu_custom_call.1}
  #allocation0 [shape = 'u32[]', space=smem, size = 0x4, offset = 0x4, fixed_abs, tag = 'smem constant byte address 0x4 - core index']
  #allocation1 [shape = 'u32[144,128]{1,0:T(1,128)}', space=vmem, size = 0x12000, scoped, tag = 'internal scratch']
  %s0 = inlined_call_operand.vmem [shape: f32[512,32], index: 0, kind: input, shape index: {}]
  %s1 = inlined_call_operand.vmem [shape: f32[5,32], index: 1, kind: input, shape index: {}]
  %s2 = inlined_call_operand.vmem [shape: f32[5,1], index: 2, kind: input, shape index: {}]
  %s3 = inlined_call_operand.vmem [shape: f32[4,5,1], index: 3, kind: output, shape index: {0}]
  %s4 = inlined_call_operand.vmem [shape: f32[4,5,1], index: 4, kind: output, shape index: {1}]
  %s5 = inlined_call_operand.vmem [shape: f32[4,5,1], index: 5, kind: output, shape index: {2}]
  %6 = xla_tuple %s3, %s4, %s5
  %s7 = sld [smem:[#allocation0]]
  $region61: #{tpu_custom_call.1} parent=0
    _
  %s9 = ssub.s32 1, %s7
  %s10 = scalar_select 0, %s9, %s7
  loop: start=0, step=1, limit=6
  $region2: #{tpu_custom_call.1} parent=0 // loop_pre_header
    _
  $region3: #{tpu_custom_call.1} parent=0 // loop_header
    %s12 = sphi 0, %s16
    %p13 = scmp.ge.s32.totalorder %s12, 6
    %s22 = sphi 0, %s24
    %s25 = sphi 0, %s22
    %s26 = sphi 0, %s25
    %s42 = sphi 0, %s26
    %s46 = sphi 0, %s46
    %s48 = sphi 0, %s46
    %s49 = sphi 0, %s48
    %s63 = sphi 0, %s49
    %s67 = sphi 0, %s67
    %s69 = sphi 0, %s67
    %s70 = sphi 0, %s69
    %s84 = sphi 0, %s70
    %s90 = sphi 0, %s92
    %s93 = sphi 0, %s90
    %s94 = sphi 0, %s93
    %s110 = sphi 0, %s94
    %s116 = sphi 0, %s118
    %s119 = sphi 0, %s116
    %s120 = sphi 0, %s119
    %s136 = sphi 0, %s120
    %s142 = sphi 0, %s144
    %s145 = sphi 0, %s142
    %s146 = sphi 0, %s145
    %s162 = sphi 0, %s146
  $region4: #{tpu_custom_call.1} parent=0 // loop_header_branch
    %15 = sbr.rel (%p13) target = $region8
  $region5: #{tpu_custom_call.1} parent=0 // loop_body
    %s17 = ssub.s32 %s12, 1
    %s18 = ssub.s32 %s12, 2
    %s19 = sadd.s32 %s12, 1
    %s20 = ssub.s32 %s12, %s19
    %p21 = scmp.eq.s32.totalorder %s20, 0
    %s23 = sadd.s32 %s22, 1
    %s24 = scalar_select %p21, %s22, %s23
    %p27 = pneg %p21
    %p28 = scmp.eq.s32.totalorder %s12, 3
    %p29 = por %p27, %p28
    %p30 = scmp.ne.s32.totalorder %s22, %s25
    %p31 = scmp.eq.s32.totalorder %s12, 0
    %p32 = por %p30, %p31
    %p33 = scmp.ne.s32.totalorder %s22, %s25
    %p34 = scmp.eq.s32.totalorder %s17, 3
    %p35 = por %p33, %p34
    %p36 = scmp.ne.s32.totalorder %s25, %s26
    %p37 = scmp.eq.s32.totalorder %s17, 0
    %p38 = por %p36, %p37
    %p39 = scmp.ne.s32.totalorder %s25, %s26
    %p40 = scmp.eq.s32.totalorder %s18, 3
    %p41 = por %p39, %p40
    %p43 = scmp.ne.s32.totalorder %s26, %s42
    %p44 = scmp.eq.s32.totalorder %s18, 0
    %p45 = por %p43, %p44
    %s47 = sadd.s32 %s46, 1
    %p50 = scmp.eq.s32.totalorder %s12, 3
    %p51 = scmp.ne.s32.totalorder %s46, %s48
    %p52 = scmp.eq.s32.totalorder %s12, 0
    %p53 = por %p51, %p52
    %p54 = scmp.ne.s32.totalorder %s46, %s48
    %p55 = scmp.eq.s32.totalorder %s17, 3
    %p56 = por %p54, %p55
    %p57 = scmp.ne.s32.totalorder %s48, %s49
    %p58 = scmp.eq.s32.totalorder %s17, 0
    %p59 = por %p57, %p58
    %p60 = scmp.ne.s32.totalorder %s48, %s49
    %p61 = scmp.eq.s32.totalorder %s18, 3
    %p62 = por %p60, %p61
    %p64 = scmp.ne.s32.totalorder %s49, %s63
    %p65 = scmp.eq.s32.totalorder %s18, 0
    %p66 = por %p64, %p65
    %s68 = sadd.s32 %s67, 1
    %p71 = scmp.eq.s32.totalorder %s12, 3
    %p72 = scmp.ne.s32.totalorder %s67, %s69
    %p73 = scmp.eq.s32.totalorder %s12, 0
    %p74 = por %p72, %p73
    %p75 = scmp.ne.s32.totalorder %s67, %s69
    %p76 = scmp.eq.s32.totalorder %s17, 3
    %p77 = por %p75, %p76
    %p78 = scmp.ne.s32.totalorder %s69, %s70
    %p79 = scmp.eq.s32.totalorder %s17, 0
    %p80 = por %p78, %p79
    %p81 = scmp.ne.s32.totalorder %s69, %s70
    %p82 = scmp.eq.s32.totalorder %s18, 3
    %p83 = por %p81, %p82
    %p85 = scmp.ne.s32.totalorder %s70, %s84
    %p86 = scmp.eq.s32.totalorder %s18, 0
    %p87 = por %p85, %p86
    %s88 = ssub.s32 %s12, %s19
    %p89 = scmp.eq.s32.totalorder %s88, 0
    %s91 = sadd.s32 %s90, 1
    %s92 = scalar_select %p89, %s90, %s91
    %p95 = pneg %p89
    %p96 = scmp.eq.s32.totalorder %s12, 3
    %p97 = por %p95, %p96
    %p98 = scmp.ne.s32.totalorder %s90, %s93
    %p99 = scmp.eq.s32.totalorder %s12, 0
    %p100 = por %p98, %p99
    %p101 = scmp.ne.s32.totalorder %s90, %s93
    %p102 = scmp.eq.s32.totalorder %s17, 3
    %p103 = por %p101, %p102
    %p104 = scmp.ne.s32.totalorder %s93, %s94
    %p105 = scmp.eq.s32.totalorder %s17, 0
    %p106 = por %p104, %p105
    %p107 = scmp.ne.s32.totalorder %s93, %s94
    %p108 = scmp.eq.s32.totalorder %s18, 3
    %p109 = por %p107, %p108
    %p111 = scmp.ne.s32.totalorder %s94, %s110
    %p112 = scmp.eq.s32.totalorder %s18, 0
    %p113 = por %p111, %p112
    %s114 = ssub.s32 %s12, %s19
    %p115 = scmp.eq.s32.totalorder %s114, 0
    %s117 = sadd.s32 %s116, 1
    %s118 = scalar_select %p115, %s116, %s117
    %p121 = pneg %p115
    %p122 = scmp.eq.s32.totalorder %s12, 3
    %p123 = por %p121, %p122
    %p124 = scmp.ne.s32.totalorder %s116, %s119
    %p125 = scmp.eq.s32.totalorder %s12, 0
    %p126 = por %p124, %p125
    %p127 = scmp.ne.s32.totalorder %s116, %s119
    %p128 = scmp.eq.s32.totalorder %s17, 3
    %p129 = por %p127, %p128
    %p130 = scmp.ne.s32.totalorder %s119, %s120
    %p131 = scmp.eq.s32.totalorder %s17, 0
    %p132 = por %p130, %p131
    %p133 = scmp.ne.s32.totalorder %s119, %s120
    %p134 = scmp.eq.s32.totalorder %s18, 3
    %p135 = por %p133, %p134
    %p137 = scmp.ne.s32.totalorder %s120, %s136
    %p138 = scmp.eq.s32.totalorder %s18, 0
    %p139 = por %p137, %p138
    %s140 = ssub.s32 %s12, %s19
    %p141 = scmp.eq.s32.totalorder %s140, 0
    %s143 = sadd.s32 %s142, 1
    %s144 = scalar_select %p141, %s142, %s143
    %p147 = pneg %p141
    %p148 = scmp.eq.s32.totalorder %s12, 3
    %p149 = por %p147, %p148
    %p150 = scmp.ne.s32.totalorder %s142, %s145
    %p151 = scmp.eq.s32.totalorder %s12, 0
    %p152 = por %p150, %p151
    %p153 = scmp.ne.s32.totalorder %s142, %s145
    %p154 = scmp.eq.s32.totalorder %s17, 3
    %p155 = por %p153, %p154
    %p156 = scmp.ne.s32.totalorder %s145, %s146
    %p157 = scmp.eq.s32.totalorder %s17, 0
    %p158 = por %p156, %p157
    %p159 = scmp.ne.s32.totalorder %s145, %s146
    %p160 = scmp.eq.s32.totalorder %s18, 3
    %p161 = por %p159, %p160
    %p163 = scmp.ne.s32.totalorder %s146, %s162
    %p164 = scmp.eq.s32.totalorder %s18, 0
    %p165 = por %p163, %p164
    %p166 = scmp.le.s32.totalorder 1, %s12
    %p167 = scmp.lt.s32.totalorder %s12, 5
    %p168 = pnand %p166, %p167
    %p169 = pneg %p168
    // Predicated region
    $region9: #{tpu_custom_call.1} parent=5 // pred_check
      _
    $region10: #{tpu_custom_call.1} parent=5 // pred_check_branch
      %171 = sbr.rel (%p168) target = $region12
    $region11: #{tpu_custom_call.1} parent=5 // pred_region
      %s172 = ssub.s32 %s12, 1
      // Predicated region
      $region13: #{tpu_custom_call.1} parent=11 // pred_check
        %p173 = pneg %p59
      $region14: #{tpu_custom_call.1} parent=11 // pred_check_branch
        %175 = sbr.rel (%p173) target = $region16
      $region15: #{tpu_custom_call.1} parent=11 // pred_region
        _
      $region16: #{tpu_custom_call.1} parent=11 // pred_fallthru
        _
      // Predicated region
      $region17: #{tpu_custom_call.1} parent=11 // pred_check
        %p176 = pneg %p80
      $region18: #{tpu_custom_call.1} parent=11 // pred_check_branch
        %178 = sbr.rel (%p176) target = $region20
      $region19: #{tpu_custom_call.1} parent=11 // pred_region
        _
      $region20: #{tpu_custom_call.1} parent=11 // pred_fallthru
        _
    $region12: #{tpu_custom_call.1} parent=5 // pred_fallthru
      _
    %p179 = scmp.lt.s32.totalorder %s12, 4
    // Predicated region
    $region21: #{tpu_custom_call.1} parent=5 // pred_check
      %p180 = pneg %p179
    $region22: #{tpu_custom_call.1} parent=5 // pred_check_branch
      %182 = sbr.rel (%p180) target = $region24
    $region23: #{tpu_custom_call.1} parent=5 // pred_region
      // Predicated region
      $region25: #{tpu_custom_call.1} parent=23 // pred_check
        %p183 = pneg %p32
      $region26: #{tpu_custom_call.1} parent=23 // pred_check_branch
        %185 = sbr.rel (%p183) target = $region28
      $region27: #{tpu_custom_call.1} parent=23 // pred_region
        %s186 = smul.u32 16, %s12
        %p187 = scmp.lt.s32.totalorder %s186, 63
        %s188 = scalar_select %p187, %s186, 63
        %s189 = smul.addr %s188, 8
        %s190 = scalar_lea.vmem %s0, %s189
        %s191 = smul.u32 16, %s12
      $region28: #{tpu_custom_call.1} parent=23 // pred_fallthru
        _
    $region24: #{tpu_custom_call.1} parent=5 // pred_fallthru
      _
    %p192 = scmp.le.s32.totalorder 1, %s12
    %p193 = scmp.lt.s32.totalorder %s12, 5
    %p194 = pnand %p192, %p193
    %p195 = pneg %p194
    // Predicated region
    $region29: #{tpu_custom_call.1} parent=5 // pred_check
      _
    $region30: #{tpu_custom_call.1} parent=5 // pred_check_branch
      %197 = sbr.rel (%p194) target = $region32
    $region31: #{tpu_custom_call.1} parent=5 // pred_region
      %s198 = ssub.s32 %s12, 1
      %s199 = smul.u32 16, %s17
      %p200 = scmp.lt.s32.totalorder %s199, 63
      %s201 = scalar_select %p200, %s199, 63
      %s202 = smul.addr %s201, 8
      %s203 = scalar_lea.vmem %s0, %s202
      %p204 = pneg %p38
      %p205 = pneg %p35
      %p206 = pneg %p59
      %p207 = pneg %p56
      %p208 = pneg %p80
      %p209 = pneg %p77
      %p210 = pneg %p106
      %p211 = pneg %p103
      %p212 = scmp.lt.s32.totalorder %s17, 3
      %s213 = scalar_select %p212, %s17, 3
      %s214 = smul.addr %s213, 8
      %s215 = scalar_lea.vmem %s3, %s214
      %p216 = pneg %p132
      %p217 = pneg %p129
      %p218 = scmp.lt.s32.totalorder %s17, 3
      %s219 = scalar_select %p218, %s17, 3
      %s220 = smul.addr %s219, 8
      %s221 = scalar_lea.vmem %s4, %s220
      %p222 = pneg %p158
      %p223 = pneg %p155
      %p224 = scmp.lt.s32.totalorder %s17, 3
      %s225 = scalar_select %p224, %s17, 3
      %s226 = smul.addr %s225, 8
      %s227 = scalar_lea.vmem %s5, %s226
      %s228 = smul.u32 16, %s17
      %p229 = scmp.lt.s32.totalorder %s228, 63
      %s230 = scalar_select %p229, %s228, 63
      %s231 = smul.addr %s230, 8
      %s232 = scalar_lea.vmem %s0, %s231
      %s233 = smul.u32 16, %s17
      %p234 = scmp.lt.s32.totalorder %s17, 3
      %s235 = scalar_select %p234, %s17, 3
      %s236 = smul.addr %s235, 8
      %s237 = scalar_lea.vmem %s3, %s236
      %p238 = scmp.lt.s32.totalorder %s17, 3
      %s239 = scalar_select %p238, %s17, 3
      %s240 = smul.addr %s239, 8
      %s241 = scalar_lea.vmem %s4, %s240
      %p242 = scmp.lt.s32.totalorder %s17, 3
      %s243 = scalar_select %p242, %s17, 3
      %s244 = smul.addr %s243, 8
      %s245 = scalar_lea.vmem %s5, %s244
      %v246 = vld [vmem:[%s232] sm:$0xff]
      %v247 = vld [vmem:[%s232 + $0x8] sm:$0xff]
      %v248 = vld [vmem:[%s232 + $0x10] sm:$0xff]
      %v249 = vld [vmem:[%s232 + $0x18] sm:$0xff]
      %v250 = vld [vmem:[%s232 + $0x20] sm:$0xff]
      %v251 = vld [vmem:[%s232 + $0x28] sm:$0xff]
      %v252 = vld [vmem:[%s232 + $0x30] sm:$0xff]
      %v253 = vld [vmem:[%s232 + $0x38] sm:$0xff]
      %v254 = vld [vmem:[%s232 + $0x40] sm:$0xff]
      %v255 = vld [vmem:[%s232 + $0x48] sm:$0xff]
      %v256 = vld [vmem:[%s232 + $0x50] sm:$0xff]
      %v257 = vld [vmem:[%s232 + $0x58] sm:$0xff]
      %v258 = vld [vmem:[%s232 + $0x60] sm:$0xff]
      %v259 = vld [vmem:[%s232 + $0x68] sm:$0xff]
      %v260 = vld [vmem:[%s232 + $0x70] sm:$0xff]
      %v261 = vld [vmem:[%s232 + $0x78] sm:$0xff]
      %v262 = vld [vmem:[%s1] sm:$0x1f]
      %vm263 = vcmask 261120
      %v265 = vsel %vm263, %v262, 0
      %v268 = vsel %vm263, %v246, 0
      %v271 = vsel %vm263, %v247, 0
      %v274 = vsel %vm263, %v248, 0
      %v277 = vsel %vm263, %v249, 0
      %v280 = vsel %vm263, %v250, 0
      %v283 = vsel %vm263, %v251, 0
      %v286 = vsel %vm263, %v252, 0
      %v289 = vsel %vm263, %v253, 0
      %v292 = vsel %vm263, %v254, 0
      %v295 = vsel %vm263, %v255, 0
      %v298 = vsel %vm263, %v256, 0
      %v301 = vsel %vm263, %v257, 0
      %v304 = vsel %vm263, %v258, 0
      %v307 = vsel %vm263, %v259, 0
      %v310 = vsel %vm263, %v260, 0
      %v313 = vsel %vm263, %v261, 0
      %315 = vmatprep.subr.mxu0 0.0
      %316 = vmatpush1.xpose.msra.mxu0 %v313
      %317 = vmatprep.subr.mxu0 0.0
      %318 = vmatpush1.xpose.msra.mxu0 %v310
      %319 = vmatprep.subr.mxu0 0.0
      %320 = vmatpush1.xpose.msra.mxu0 %v307
      %321 = vmatprep.subr.mxu0 0.0
      %322 = vmatpush1.xpose.msra.mxu0 %v304
      %323 = vmatprep.subr.mxu0 0.0
      %324 = vmatpush1.xpose.msra.mxu0 %v301
      %325 = vmatprep.subr.mxu0 0.0
      %326 = vmatpush1.xpose.msra.mxu0 %v298
      %327 = vmatprep.subr.mxu0 0.0
      %328 = vmatpush1.xpose.msra.mxu0 %v295
      %329 = vmatprep.subr.mxu0 0.0
      %330 = vmatpush1.xpose.msra.mxu0 %v292
      %331 = vmatprep.subr.mxu0 0.0
      %332 = vmatpush1.xpose.msra.mxu0 %v289
      %333 = vmatprep.subr.mxu0 0.0
      %334 = vmatpush1.xpose.msra.mxu0 %v286
      %335 = vmatprep.subr.mxu0 0.0
      %336 = vmatpush1.xpose.msra.mxu0 %v283
      %337 = vmatprep.subr.mxu0 0.0
      %338 = vmatpush1.xpose.msra.mxu0 %v280
      %339 = vmatprep.subr.mxu0 0.0
      %340 = vmatpush1.xpose.msra.mxu0 %v277
      %341 = vmatprep.subr.mxu0 0.0
      %342 = vmatpush1.xpose.msra.mxu0 %v274
      %343 = vmatprep.subr.mxu0 0.0
      %344 = vmatpush1.xpose.msra.mxu0 %v271
      %345 = vmatprep.subr.mxu0 0.0
      %346 = vmatpush1.xpose.msra.mxu0 %v268
      %347 = vmatprep.subr.mxu0 0.0
      %348 = vmatpush2.xpose.msra.mxu0 0.0
      %349 = vmatprep.subr.mxu0 0.0
      %350 = vmatpush2.xpose.msra.mxu0 0.0
      %351 = vmatprep.subr.mxu0 0.0
      %352 = vmatpush2.xpose.msra.mxu0 0.0
      %353 = vmatprep.subr.mxu0 0.0
      %354 = vmatpush2.xpose.msra.mxu0 0.0
      %355 = vmatprep.subr.mxu0 0.0
      %356 = vmatpush2.xpose.msra.mxu0 0.0
      %357 = vmatprep.subr.mxu0 0.0
      %358 = vmatpush2.xpose.msra.mxu0 0.0
      %359 = vmatprep.subr.mxu0 0.0
      %360 = vmatpush2.xpose.msra.mxu0 0.0
      %361 = vmatprep.subr.mxu0 0.0
      %362 = vmatpush2.xpose.msra.mxu0 0.0
      %363 = vmatprep.subr.mxu0 0.0
      %364 = vmatpush2.xpose.msra.mxu0 0.0
      %365 = vmatprep.subr.mxu0 0.0
      %366 = vmatpush2.xpose.msra.mxu0 0.0
      %367 = vmatprep.subr.mxu0 0.0
      %368 = vmatpush2.xpose.msra.mxu0 0.0
      %369 = vmatprep.subr.mxu0 0.0
      %370 = vmatpush2.xpose.msra.mxu0 0.0
      %371 = vmatprep.subr.mxu0 0.0
      %372 = vmatpush2.xpose.msra.mxu0 0.0
      %373 = vmatprep.subr.mxu0 0.0
      %374 = vmatpush2.xpose.msra.mxu0 0.0
      %375 = vmatprep.subr.mxu0 0.0
      %376 = vmatpush2.xpose.msra.mxu0 0.0
      %377 = vmatprep.subr.mxu0 0.0
      %378 = vmatpush2.xpose.msra.mxu0 0.0
      %379 = vmatprep.mubr.f32.mxu0 0.0
      %380 = vmatmul.mubr.f32.gmra.mxu0 %v265
      %v381 = vpop.f32.mrf.mxu0
      %v382 = vadd.f32 0.0, %v381
      %v383 = vpop.f32.mrf.mxu0
      %384 = vdwg.mxu0
      %v385 = vld [vmem:[%s2] sm:$0x1f]
      %v386 = vmul.f32 %v382, 2.0
      %388 = vset.pattern.permute.xlu0 0
      %389 = vperm.xlu0 %388, %v385
      %v390 = vpop.permute.xlu0 %389
      %v392 = vsub.f32 %v390, %v386
      %v393 = vlaneseq
      %v394 = vshrl.u32 %v393, 7
      %vm395 = vcmask 1044480
      %v396 = vsel %vm395, %v392, inf
      %v397 = vrot.slane %v396, 4
      %v398 = vmin.f32 %v396, %v397
      %v399 = vrot.slane %v398, 2
      %v400 = vmin.f32 %v398, %v399
      %v401 = vrot.slane %v400, 1
      %v402 = vmin.f32 %v400, %v401
      %vm403 = vcmp.le.f32.partialorder %v392, %v402
      %v404 = vsel %vm403, %v394, 5
      %v405 = vsel %vm395, %v404, 2147483647
      %v406 = vrot.slane %v405, 4
      %vm407 = vcmp.lt.s32.totalorder %v405, %v406
      %v408 = vsel %vm407, %v405, %v406
      %v409 = vrot.slane %v408, 2
      %vm410 = vcmp.lt.s32.totalorder %v408, %v409
      %v411 = vsel %vm410, %v408, %v409
      %v412 = vrot.slane %v411, 1
      %vm413 = vcmp.lt.s32.totalorder %v411, %v412
      %v414 = vsel %vm413, %v411, %v412
      %vm415 = vcmp.eq.s32.totalorder %v394, %v414
      %v416 = vsel %vm415, 1, 0
      %v417 = vcvt.s32.f32 %v416
      %s418 = smul.u32 %s17, 128
      %v419 = vlaneseq
      %v420 = vand.u32 %v419, 127
      %v421 = vstv %s418
      %v422 = vadd.s32 %v421, %v420
      %vm423 = vcmp.lt.s32.totalorder %v422, 500
      %v424 = vsel %vm423, 1, 0
      %v425 = vcvt.s32.f32 %v424
      %v426 = vmul.f32 %v382, 1.442695
      %v427 = vpow.pop %v426
      %v428 = vmul.f32 %v427, %v425
      %v429 = vmul.f32 %v417, %v428
      %v430 = vsel %vm395, %v429, 0.0
      %431 = vadd.xlane.f32.xlu0 %v430
      %v432 = vpop.xlane.xlu0 %431
      %vm433 = vcmask 4096
      %434 = vst.msk [vmem:[%s237] sm:$0x1f] %vm433, %v432
      %v435 = vmul.f32 %v417, %v425
      %v436 = vsel %vm395, %v435, 0.0
      %437 = vadd.xlane.f32.xlu0 %v436
      %v438 = vpop.xlane.xlu0 %437
      %439 = vst.msk [vmem:[%s241] sm:$0x1f] %vm433, %v438
      %v440 = vsel %vm395, %v428, 0.0
      %441 = vadd.xlane.f32.xlu0 %v440
      %v442 = vpop.xlane.xlu0 %441
      %443 = vst.msk [vmem:[%s245] sm:$0x1f] %vm433, %v442
      %p444 = scmp.lt.s32.totalorder %s17, 3
      %s445 = scalar_select %p444, %s17, 3
      %s446 = smul.addr %s445, 8
      %s447 = scalar_lea.vmem %s3, %s446
      %p448 = scmp.lt.s32.totalorder %s17, 3
      %s449 = scalar_select %p448, %s17, 3
      %s450 = smul.addr %s449, 8
      %s451 = scalar_lea.vmem %s4, %s450
      %p452 = scmp.lt.s32.totalorder %s17, 3
      %s453 = scalar_select %p452, %s17, 3
      %s454 = smul.addr %s453, 8
      %s455 = scalar_lea.vmem %s5, %s454
      // Predicated region
      $region33: #{tpu_custom_call.1} parent=31 // pred_check
        %p456 = pneg %p103
      $region34: #{tpu_custom_call.1} parent=31 // pred_check_branch
        %458 = sbr.rel (%p456) target = $region36
      $region35: #{tpu_custom_call.1} parent=31 // pred_region
        _
      $region36: #{tpu_custom_call.1} parent=31 // pred_fallthru
        _
      // Predicated region
      $region37: #{tpu_custom_call.1} parent=31 // pred_check
        %p459 = pneg %p129
      $region38: #{tpu_custom_call.1} parent=31 // pred_check_branch
        %461 = sbr.rel (%p459) target = $region40
      $region39: #{tpu_custom_call.1} parent=31 // pred_region
        _
      $region40: #{tpu_custom_call.1} parent=31 // pred_fallthru
        _
      // Predicated region
      $region41: #{tpu_custom_call.1} parent=31 // pred_check
        %p462 = pneg %p155
      $region42: #{tpu_custom_call.1} parent=31 // pred_check_branch
        %464 = sbr.rel (%p462) target = $region44
      $region43: #{tpu_custom_call.1} parent=31 // pred_region
        _
      $region44: #{tpu_custom_call.1} parent=31 // pred_fallthru
        _
    $region32: #{tpu_custom_call.1} parent=5 // pred_fallthru
      _
    %p465 = scmp.le.s32.totalorder 2, %s12
    // Predicated region
    $region45: #{tpu_custom_call.1} parent=5 // pred_check
      %p466 = pneg %p465
    $region46: #{tpu_custom_call.1} parent=5 // pred_check_branch
      %468 = sbr.rel (%p466) target = $region48
    $region47: #{tpu_custom_call.1} parent=5 // pred_region
      %s469 = ssub.s32 %s12, 2
      // Predicated region
      $region49: #{tpu_custom_call.1} parent=47 // pred_check
        %p470 = pneg %p109
      $region50: #{tpu_custom_call.1} parent=47 // pred_check_branch
        %472 = sbr.rel (%p470) target = $region52
      $region51: #{tpu_custom_call.1} parent=47 // pred_region
        %p473 = scmp.lt.s32.totalorder %s18, 3
        %s474 = scalar_select %p473, %s18, 3
        %s475 = smul.addr %s474, 8
        %s476 = scalar_lea.vmem %s3, %s475
      $region52: #{tpu_custom_call.1} parent=47 // pred_fallthru
        _
      // Predicated region
      $region53: #{tpu_custom_call.1} parent=47 // pred_check
        %p477 = pneg %p135
      $region54: #{tpu_custom_call.1} parent=47 // pred_check_branch
        %479 = sbr.rel (%p477) target = $region56
      $region55: #{tpu_custom_call.1} parent=47 // pred_region
        %p480 = scmp.lt.s32.totalorder %s18, 3
        %s481 = scalar_select %p480, %s18, 3
        %s482 = smul.addr %s481, 8
        %s483 = scalar_lea.vmem %s4, %s482
      $region56: #{tpu_custom_call.1} parent=47 // pred_fallthru
        _
      // Predicated region
      $region57: #{tpu_custom_call.1} parent=47 // pred_check
        %p484 = pneg %p161
      $region58: #{tpu_custom_call.1} parent=47 // pred_check_branch
        %486 = sbr.rel (%p484) target = $region60
      $region59: #{tpu_custom_call.1} parent=47 // pred_region
        %p487 = scmp.lt.s32.totalorder %s18, 3
        %s488 = scalar_select %p487, %s18, 3
        %s489 = smul.addr %s488, 8
        %s490 = scalar_lea.vmem %s5, %s489
      $region60: #{tpu_custom_call.1} parent=47 // pred_fallthru
        _
    $region48: #{tpu_custom_call.1} parent=5 // pred_fallthru
      _
  $region6: #{tpu_custom_call.1} parent=0 // loop_footer
    %s16 = sadd.s32 1, %s12
  $region7: #{tpu_custom_call.1} parent=0 // loop_footer_branch
    %11 = sbr.rel target = $region3
  $region8: #{tpu_custom_call.1} parent=0 // loop_exit
    _

</llo_original>
